<compile_context>
chip_gen: v6e
topology: v6e:2x2x1
jax: 0.10.0
libtpu: 0.0.40
codegen_flags: <defaults>
</compile_context>

<pallas_src>
import jax
import jax.numpy as jnp
from jax.experimental import pallas as pl
from jax.experimental.pallas import tpu as pltpu


def _round_up(x, m):
    return ((x + m - 1) // m) * m


def _vmem_budget_bytes():
    """Conservative per-core VMEM budget (leave headroom, esp. on v7x's 64 MiB)."""
    try:
        cap = pltpu.get_tpu_info().vmem_capacity_bytes
        return int(cap) * 3 // 4
    except Exception:
        return 48 * 1024 * 1024


# ---------------- Pallas kernels ----------------


def make_gru_kernel(n_layers, Hp):
    """Fused multi-layer GRU step (seq_len == 1). Gate blocks are Hp-wide (lane aligned)."""

    def kernel(*refs):
        x_ref, hid_ref = refs[0], refs[1]
        layer_refs = refs[2:2 + 4 * n_layers]
        hnew_ref = refs[2 + 4 * n_layers]

        x = x_ref[...]
        for l in range(n_layers):
            wih, whh, b_rzn, b_hn = layer_refs[4 * l: 4 * l + 4]
            h = hid_ref[l]
            # bf16-stored weights, f32 compute
            gi = jnp.dot(x, wih[...].astype(jnp.float32),
                         preferred_element_type=jnp.float32) + b_rzn[...]
            gh = jnp.dot(h, whh[...].astype(jnp.float32),
                         preferred_element_type=jnp.float32)
            r = jax.nn.sigmoid(gi[:, 0:Hp] + gh[:, 0:Hp])
            z = jax.nn.sigmoid(gi[:, Hp:2 * Hp] + gh[:, Hp:2 * Hp])
            n = jnp.tanh(gi[:, 2 * Hp:3 * Hp] + r * (gh[:, 2 * Hp:3 * Hp] + b_hn[...]))
            h_new = (1.0 - z) * n + z * h
            hnew_ref[l] = h_new
            x = h_new

    return kernel


def fc_kernel(x_ref, w_ref, b_ref, o_ref):
    """One lane-dense vocab tile of fc_out: (Bp, Hp) @ (Hp, TN) + (1, TN)."""
    o_ref[...] = (jnp.dot(x_ref[...], w_ref[...].astype(jnp.float32),
                          preferred_element_type=jnp.float32) + b_ref[...])


# ---------------- offline parameter preparation (PyTorch layout -> kernel layout) ----------------


def prepare_kernel_params(params, max_vocab_tile=2048, vmem_budget=None):
    """Gate-stack & lane-pad GRU weights (bf16), fold r/z biases, pad/transpose fc (bf16)."""
    if vmem_budget is None:
        vmem_budget = _vmem_budget_bytes()

    emb = params["embedding"]
    emb_dim = emb.shape[1]
    H = params["layers"][0]["w_hh"].shape[1]
    n_layers = len(params["layers"])

    LANE = 128
    TILE_N = 256          # v6e/v7x MXU is 2x256^2; 256 is also a 128-multiple for v5e
    Hp = _round_up(H, LANE)
    Ep = _round_up(emb_dim, LANE)

    layers = []
    for l, layer in enumerate(params["layers"]):
        in_dim = emb_dim if l == 0 else H
        in_pad = Ep if l == 0 else Hp
        w_ih_t = jnp.transpose(layer["w_ih"])      # (in_dim, 3H), gate order [r | z | n]
        w_hh_t = jnp.transpose(layer["w_hh"])      # (H, 3H)
        b_ih, b_hh = layer["b_ih"], layer["b_hh"]

        wih = jnp.zeros((in_pad, 3 * Hp), jnp.float32)
        whh = jnp.zeros((Hp, 3 * Hp), jnp.float32)
        for g in range(3):                         # each gate gets its own lane-aligned block
            wih = wih.at[:in_dim, g * Hp:g * Hp + H].set(w_ih_t[:, g * H:(g + 1) * H])
            whh = whh.at[:H, g * Hp:g * Hp + H].set(w_hh_t[:, g * H:(g + 1) * H])

        # r/z: sigmoid(xW + hU + (b_ih + b_hh)) -> fold.  n: keep b_ih with gi; b_hh_n sits
        # inside r*(...) so it stays separate.
        b_rzn = jnp.zeros((1, 3 * Hp), jnp.float32)
        b_rzn = b_rzn.at[0, 0:H].set(b_ih[0:H] + b_hh[0:H])
        b_rzn = b_rzn.at[0, Hp:Hp + H].set(b_ih[H:2 * H] + b_hh[H:2 * H])
        b_rzn = b_rzn.at[0, 2 * Hp:2 * Hp + H].set(b_ih[2 * H:3 * H])
        b_hn = jnp.zeros((1, Hp), jnp.float32).at[0, :H].set(b_hh[2 * H:3 * H])

        layers.append((wih.astype(jnp.bfloat16), whh.astype(jnp.bfloat16), b_rzn, b_hn))

    # fc_out: lane-dense, vocab padded up to a multiple of the chosen tile
    fc_w, fc_b = params["fc_w"], params["fc_b"]    # (V, H), (V,)
    V = fc_w.shape[0]

    tn = min(max_vocab_tile, _round_up(V, TILE_N))
    # keep ~4 in-flight bf16 weight tiles + logits/bias tiles well under half the budget
    per_col_bytes = 4 * Hp * 2 + 4 * 8 * 4
    tn_cap = max(TILE_N, ((vmem_budget // 2) // per_col_bytes // TILE_N) * TILE_N)
    tn = max(TILE_N, min(tn, tn_cap))
    V_pad = _round_up(V, tn)

    fc_w_t = jnp.zeros((Hp, V_pad), jnp.float32).at[:H, :V].set(jnp.transpose(fc_w))
    fc_b_p = jnp.zeros((1, V_pad), jnp.float32).at[0, :V].set(fc_b)

    return {"embedding": emb, "layers": layers,
            "fc_w_t": fc_w_t.astype(jnp.bfloat16), "fc_b": fc_b_p,
            "n_layers": n_layers, "H": H, "Hp": Hp, "emb_dim": emb_dim, "Ep": Ep,
            "vocab": V, "vocab_pad": V_pad, "tn": tn,
            "vmem_budget": vmem_budget}


# ---------------- wrapper ----------------


def decoder_forward(tokens, hidden, kp):
    """tokens: (B,) int32 ; hidden: (n_layers, B, H)
    returns (output (B, 1, V), new_hidden (n_layers, B, H))"""
    n_layers, B, H = hidden.shape
    Hp, Ep = kp["Hp"], kp["Ep"]
    V, V_pad, TN = kp["vocab"], kp["vocab_pad"], kp["tn"]
    n_tiles = V_pad // TN
    Bp = _round_up(max(B, 8), 8)
    vmem_budget = kp["vmem_budget"]

    # --- embedding lookup (single XLA gather, clamped ids) + sublane/lane padding ---
    tok = jnp.clip(tokens.astype(jnp.int32), 0, kp["embedding"].shape[0] - 1)
    x_emb = jnp.take(kp["embedding"], tok, axis=0)                       # (B, emb_dim)
    x0 = jnp.zeros((Bp, Ep), jnp.float32).at[:B, :kp["emb_dim"]].set(x_emb)
    hid_p = jnp.zeros((n_layers, Bp, Hp), jnp.float32).at[:, :B, :H].set(hidden)

    flat_weights = []
    for (wih, whh, b_rzn, b_hn) in kp["layers"]:
        flat_weights += [wih, whh, b_rzn, b_hn]

    # --- fused GRU stack: one ungridded call, everything resident in VMEM, single-buffered ---
    new_hidden_p = pl.pallas_call(
        make_gru_kernel(n_layers, Hp),
        out_shape=jax.ShapeDtypeStruct((n_layers, Bp, Hp), jnp.float32),
        compiler_params=pltpu.CompilerParams(vmem_limit_bytes=vmem_budget),
    )(x0, hid_p, *flat_weights)

    # --- fc_out: lane-dense vocab tiles; 'parallel' so both v7x TensorCores share the work ---
    x_last = new_hidden_p[n_layers - 1]                                  # (Bp, Hp)

    if n_tiles > 1:
        fc_buf = min(3, n_tiles)
        x_spec = pl.BlockSpec((Bp, Hp), lambda j: (0, 0), pipeline_mode=pl.Buffered(1))
        w_spec = pl.BlockSpec((Hp, TN), lambda j: (0, j), pipeline_mode=pl.Buffered(fc_buf))
        b_spec = pl.BlockSpec((1, TN), lambda j: (0, j), pipeline_mode=pl.Buffered(fc_buf))
    else:  # single tile: no pipelining to deepen
        x_spec = pl.BlockSpec((Bp, Hp), lambda j: (0, 0))
        w_spec = pl.BlockSpec((Hp, TN), lambda j: (0, j))
        b_spec = pl.BlockSpec((1, TN), lambda j: (0, j))

    logits_pad = pl.pallas_call(
        fc_kernel,
        out_shape=jax.ShapeDtypeStruct((Bp, V_pad), jnp.float32),
        grid_spec=pltpu.PrefetchScalarGridSpec(
            num_scalar_prefetch=0,
            grid=(n_tiles,),
            in_specs=[x_spec, w_spec, b_spec],
            out_specs=pl.BlockSpec((Bp, TN), lambda j: (0, j)),
        ),
        compiler_params=pltpu.CompilerParams(
            dimension_semantics=("parallel",),
            vmem_limit_bytes=vmem_budget),
    )(x_last, kp["fc_w_t"], kp["fc_b"])

    logits = logits_pad[:B, :V]
    new_hidden = new_hidden_p[:, :B, :H]
    return logits[:, None, :], new_hidden            # (B, 1, V) like PyTorch (B, seq=1, V)


# ---------------- pure-JAX reference (PyTorch GRU semantics) ----------------


def decoder_forward_ref(tokens, hidden, params):
    H = hidden.shape[-1]
    x = params["embedding"][tokens]
    new_hidden = []
    for l, layer in enumerate(params["layers"]):
        h = hidden[l]
        gi = x @ layer["w_ih"].T + layer["b_ih"]
        gh = h @ layer["w_hh"].T + layer["b_hh"]
        r = jax.nn.sigmoid(gi[:, 0:H] + gh[:, 0:H])
        z = jax.nn.sigmoid(gi[:, H:2 * H] + gh[:, H:2 * H])
        n = jnp.tanh(gi[:, 2 * H:] + r * gh[:, 2 * H:])
        h_new = (1.0 - z) * n + z * h
        new_hidden.append(h_new)
        x = h_new
    logits = x @ params["fc_w"].T + params["fc_b"]
    return logits[:, None, :], jnp.stack(new_hidden, 0)


def round_weights_like_kernel(params):
    """Weights as stored by the kernel (bf16-rounded); biases/embedding stay f32."""
    q = lambda w: w.astype(jnp.bfloat16).astype(jnp.float32)
    out = {"embedding": params["embedding"], "fc_w": q(params["fc_w"]),
           "fc_b": params["fc_b"], "layers": []}
    for layer in params["layers"]:
        out["layers"].append({"w_ih": q(layer["w_ih"]), "w_hh": q(layer["w_hh"]),
                              "b_ih": layer["b_ih"], "b_hh": layer["b_hh"]})
    return out


# ---------------- parameter init (PyTorch-like layout & ranges) ----------------


def init_params(key, output_dim, emb_dim, hidden_dim, n_layers):
    keys = jax.random.split(key, 1 + 4 * n_layers + 2)
    ki = iter(keys)
    params = {"embedding": jax.random.normal(next(ki), (output_dim, emb_dim), jnp.float32)}
    bound = float(1.0 / (hidden_dim ** 0.5))
    layers = []
    for l in range(n_layers):
        in_dim = emb_dim if l == 0 else hidden_dim
        layers.append({
            "w_ih": jax.random.uniform(next(ki), (3 * hidden_dim, in_dim), jnp.float32, -bound, bound),
            "w_hh": jax.random.uniform(next(ki), (3 * hidden_dim, hidden_dim), jnp.float32, -bound, bound),
            "b_ih": jax.random.uniform(next(ki), (3 * hidden_dim,), jnp.float32, -bound, bound),
            "b_hh": jax.random.uniform(next(ki), (3 * hidden_dim,), jnp.float32, -bound, bound),
        })
    params["layers"] = layers
    params["fc_w"] = jax.random.uniform(next(ki), (output_dim, hidden_dim), jnp.float32, -bound, bound)
    params["fc_b"] = jax.random.uniform(next(ki), (output_dim,), jnp.float32, -bound, bound)
    return params


# ---------------- main ----------------

if __name__ == "__main__":
    OUTPUT_DIM = 32   # vocab size
    EMB_DIM = 16
    HIDDEN_DIM = 32
    N_LAYERS = 2
    BATCH = 4

    key = jax.random.PRNGKey(0)
    k_par, k_tok, k_hid = jax.random.split(key, 3)

    params = init_params(k_par, OUTPUT_DIM, EMB_DIM, HIDDEN_DIM, N_LAYERS)
    kparams = prepare_kernel_params(params)

    tokens = jax.random.randint(k_tok, (BATCH,), 0, OUTPUT_DIM, dtype=jnp.int32)
    hidden = jax.random.normal(k_hid, (N_LAYERS, BATCH, HIDDEN_DIM), jnp.float32)

    out, new_hidden = decoder_forward(tokens, hidden, kparams)
    out = jax.block_until_ready(out)
    new_hidden = jax.block_until_ready(new_hidden)

    # sanity: match pure-JAX reference using the same bf16-rounded weights
    ref_params = round_weights_like_kernel(params)
    out_ref, hid_ref = decoder_forward_ref(tokens, hidden, ref_params)
    assert out.shape == (BATCH, 1, OUTPUT_DIM)
    assert new_hidden.shape == (N_LAYERS, BATCH, HIDDEN_DIM)
    assert jnp.allclose(out, out_ref, atol=2e-4, rtol=2e-4), \
        float(jnp.max(jnp.abs(out - out_ref)))
    assert jnp.allclose(new_hidden, hid_ref, atol=2e-4, rtol=2e-4), \
        float(jnp.max(jnp.abs(new_hidden - hid_ref)))

    print("KERNEL_OK")
</pallas_src>

<mosaic_0001>
module attributes {stable_mosaic.version = 11 : i64} {
  func.func @kernel(%arg0: memref<8x128xf32, #tpu.memory_space<vmem>>, %arg1: memref<2x8x128xf32, #tpu.memory_space<vmem>>, %arg2: memref<128x384xbf16, #tpu.memory_space<vmem>>, %arg3: memref<128x384xbf16, #tpu.memory_space<vmem>>, %arg4: memref<1x384xf32, #tpu.memory_space<vmem>>, %arg5: memref<1x128xf32, #tpu.memory_space<vmem>>, %arg6: memref<128x384xbf16, #tpu.memory_space<vmem>>, %arg7: memref<128x384xbf16, #tpu.memory_space<vmem>>, %arg8: memref<1x384xf32, #tpu.memory_space<vmem>>, %arg9: memref<1x128xf32, #tpu.memory_space<vmem>>, %arg10: memref<2x8x128xf32, #tpu.memory_space<vmem>>) attributes {dimension_semantics = [], scalar_prefetch = 0 : i64, scratch_operands = 0 : i64, tpu.core_type = #tpu.core_type<tc>} {
    %c0 = arith.constant 0 : index
    %c0_0 = arith.constant 0 : index
    %0 = vector.load %arg0[%c0, %c0_0] : memref<8x128xf32, #tpu.memory_space<vmem>>, vector<8x128xf32>
    %c0_1 = arith.constant 0 : index
    %c0_2 = arith.constant 0 : index
    %c0_3 = arith.constant 0 : index
    %1 = vector.load %arg1[%c0_1, %c0_2, %c0_3] : memref<2x8x128xf32, #tpu.memory_space<vmem>>, vector<1x8x128xf32>
    %2 = vector.shape_cast %1 : vector<1x8x128xf32> to vector<8x128xf32>
    %c0_4 = arith.constant 0 : index
    %c0_5 = arith.constant 0 : index
    %3 = vector.load %arg2[%c0_4, %c0_5] : memref<128x384xbf16, #tpu.memory_space<vmem>>, vector<128x384xbf16>
    %4 = arith.extf %3 : vector<128x384xbf16> to vector<128x384xf32>
    %cst = arith.constant dense<0.000000e+00> : vector<8x384xf32>
    %5 = tpu.matmul %0, %4, %cst {dimension_numbers = #tpu.dot_dimension_numbers<[1], [0], [0], [1], [0, 0, 1, 1], [], []>} : vector<8x128xf32>, vector<128x384xf32>, vector<8x384xf32> -> vector<8x384xf32>
    %c0_6 = arith.constant 0 : index
    %c0_7 = arith.constant 0 : index
    %6 = vector.load %arg4[%c0_6, %c0_7] : memref<1x384xf32, #tpu.memory_space<vmem>>, vector<1x384xf32>
    %7 = vector.broadcast %6 : vector<1x384xf32> to vector<8x384xf32>
    %8 = arith.addf %5, %7 : vector<8x384xf32>
    %c0_8 = arith.constant 0 : index
    %c0_9 = arith.constant 0 : index
    %9 = vector.load %arg3[%c0_8, %c0_9] : memref<128x384xbf16, #tpu.memory_space<vmem>>, vector<128x384xbf16>
    %10 = arith.extf %9 : vector<128x384xbf16> to vector<128x384xf32>
    %cst_10 = arith.constant dense<0.000000e+00> : vector<8x384xf32>
    %11 = tpu.matmul %2, %10, %cst_10 {dimension_numbers = #tpu.dot_dimension_numbers<[1], [0], [0], [1], [0, 0, 1, 1], [], []>} : vector<8x128xf32>, vector<128x384xf32>, vector<8x384xf32> -> vector<8x384xf32>
    %12 = vector.extract_strided_slice %8 {offsets = [0, 0], sizes = [8, 128], strides = [1, 1]} : vector<8x384xf32> to vector<8x128xf32>
    %13 = vector.extract_strided_slice %11 {offsets = [0, 0], sizes = [8, 128], strides = [1, 1]} : vector<8x384xf32> to vector<8x128xf32>
    %14 = arith.addf %12, %13 : vector<8x128xf32>
    %15 = arith.negf %14 : vector<8x128xf32>
    %16 = math.exp %15 : vector<8x128xf32>
    %cst_11 = arith.constant 1.000000e+00 : f32
    %17 = vector.broadcast %cst_11 : f32 to vector<8x128xf32>
    %18 = arith.addf %17, %16 : vector<8x128xf32>
    %19 = arith.divf %17, %18 : vector<8x128xf32>
    %20 = vector.extract_strided_slice %8 {offsets = [0, 128], sizes = [8, 128], strides = [1, 1]} : vector<8x384xf32> to vector<8x128xf32>
    %21 = vector.extract_strided_slice %11 {offsets = [0, 128], sizes = [8, 128], strides = [1, 1]} : vector<8x384xf32> to vector<8x128xf32>
    %22 = arith.addf %20, %21 : vector<8x128xf32>
    %23 = arith.negf %22 : vector<8x128xf32>
    %24 = math.exp %23 : vector<8x128xf32>
    %cst_12 = arith.constant 1.000000e+00 : f32
    %25 = vector.broadcast %cst_12 : f32 to vector<8x128xf32>
    %26 = arith.addf %25, %24 : vector<8x128xf32>
    %27 = arith.divf %25, %26 : vector<8x128xf32>
    %28 = vector.extract_strided_slice %8 {offsets = [0, 256], sizes = [8, 128], strides = [1, 1]} : vector<8x384xf32> to vector<8x128xf32>
    %29 = vector.extract_strided_slice %11 {offsets = [0, 256], sizes = [8, 128], strides = [1, 1]} : vector<8x384xf32> to vector<8x128xf32>
    %c0_13 = arith.constant 0 : index
    %c0_14 = arith.constant 0 : index
    %30 = vector.load %arg5[%c0_13, %c0_14] : memref<1x128xf32, #tpu.memory_space<vmem>>, vector<1x128xf32>
    %31 = vector.broadcast %30 : vector<1x128xf32> to vector<8x128xf32>
    %32 = arith.addf %29, %31 : vector<8x128xf32>
    %33 = arith.mulf %19, %32 : vector<8x128xf32>
    %34 = arith.addf %28, %33 : vector<8x128xf32>
    %35 = math.tanh %34 : vector<8x128xf32>
    %cst_15 = arith.constant 1.000000e+00 : f32
    %36 = vector.broadcast %cst_15 : f32 to vector<8x128xf32>
    %37 = arith.subf %36, %27 : vector<8x128xf32>
    %38 = arith.mulf %37, %35 : vector<8x128xf32>
    %39 = arith.mulf %27, %2 : vector<8x128xf32>
    %40 = arith.addf %38, %39 : vector<8x128xf32>
    %c0_16 = arith.constant 0 : index
    %c0_17 = arith.constant 0 : index
    %c0_18 = arith.constant 0 : index
    %41 = vector.load %arg10[%c0_16, %c0_17, %c0_18] : memref<2x8x128xf32, #tpu.memory_space<vmem>>, vector<1x8x128xf32>
    %42 = vector.shape_cast %41 : vector<1x8x128xf32> to vector<8x128xf32>
    %43 = vector.shape_cast %40 : vector<8x128xf32> to vector<1x8x128xf32>
    tpu.vector_store %arg10[%c0_16, %c0_17, %c0_18], %43 {strides = array<i32>} : memref<2x8x128xf32, #tpu.memory_space<vmem>>, vector<1x8x128xf32>,
    %c1 = arith.constant 1 : index
    %c0_19 = arith.constant 0 : index
    %c0_20 = arith.constant 0 : index
    %44 = vector.load %arg1[%c1, %c0_19, %c0_20] : memref<2x8x128xf32, #tpu.memory_space<vmem>>, vector<1x8x128xf32>
    %45 = vector.shape_cast %44 : vector<1x8x128xf32> to vector<8x128xf32>
    %c0_21 = arith.constant 0 : index
    %c0_22 = arith.constant 0 : index
    %46 = vector.load %arg6[%c0_21, %c0_22] : memref<128x384xbf16, #tpu.memory_space<vmem>>, vector<128x384xbf16>
    %47 = arith.extf %46 : vector<128x384xbf16> to vector<128x384xf32>
    %cst_23 = arith.constant dense<0.000000e+00> : vector<8x384xf32>
    %48 = tpu.matmul %40, %47, %cst_23 {dimension_numbers = #tpu.dot_dimension_numbers<[1], [0], [0], [1], [0, 0, 1, 1], [], []>} : vector<8x128xf32>, vector<128x384xf32>, vector<8x384xf32> -> vector<8x384xf32>
    %c0_24 = arith.constant 0 : index
    %c0_25 = arith.constant 0 : index
    %49 = vector.load %arg8[%c0_24, %c0_25] : memref<1x384xf32, #tpu.memory_space<vmem>>, vector<1x384xf32>
    %50 = vector.broadcast %49 : vector<1x384xf32> to vector<8x384xf32>
    %51 = arith.addf %48, %50 : vector<8x384xf32>
    %c0_26 = arith.constant 0 : index
    %c0_27 = arith.constant 0 : index
    %52 = vector.load %arg7[%c0_26, %c0_27] : memref<128x384xbf16, #tpu.memory_space<vmem>>, vector<128x384xbf16>
    %53 = arith.extf %52 : vector<128x384xbf16> to vector<128x384xf32>
    %cst_28 = arith.constant dense<0.000000e+00> : vector<8x384xf32>
    %54 = tpu.matmul %45, %53, %cst_28 {dimension_numbers = #tpu.dot_dimension_numbers<[1], [0], [0], [1], [0, 0, 1, 1], [], []>} : vector<8x128xf32>, vector<128x384xf32>, vector<8x384xf32> -> vector<8x384xf32>
    %55 = vector.extract_strided_slice %51 {offsets = [0, 0], sizes = [8, 128], strides = [1, 1]} : vector<8x384xf32> to vector<8x128xf32>
    %56 = vector.extract_strided_slice %54 {offsets = [0, 0], sizes = [8, 128], strides = [1, 1]} : vector<8x384xf32> to vector<8x128xf32>
    %57 = arith.addf %55, %56 : vector<8x128xf32>
    %58 = arith.negf %57 : vector<8x128xf32>
    %59 = math.exp %58 : vector<8x128xf32>
    %cst_29 = arith.constant 1.000000e+00 : f32
    %60 = vector.broadcast %cst_29 : f32 to vector<8x128xf32>
    %61 = arith.addf %60, %59 : vector<8x128xf32>
    %62 = arith.divf %60, %61 : vector<8x128xf32>
    %63 = vector.extract_strided_slice %51 {offsets = [0, 128], sizes = [8, 128], strides = [1, 1]} : vector<8x384xf32> to vector<8x128xf32>
    %64 = vector.extract_strided_slice %54 {offsets = [0, 128], sizes = [8, 128], strides = [1, 1]} : vector<8x384xf32> to vector<8x128xf32>
    %65 = arith.addf %63, %64 : vector<8x128xf32>
    %66 = arith.negf %65 : vector<8x128xf32>
    %67 = math.exp %66 : vector<8x128xf32>
    %cst_30 = arith.constant 1.000000e+00 : f32
    %68 = vector.broadcast %cst_30 : f32 to vector<8x128xf32>
    %69 = arith.addf %68, %67 : vector<8x128xf32>
    %70 = arith.divf %68, %69 : vector<8x128xf32>
    %71 = vector.extract_strided_slice %51 {offsets = [0, 256], sizes = [8, 128], strides = [1, 1]} : vector<8x384xf32> to vector<8x128xf32>
    %72 = vector.extract_strided_slice %54 {offsets = [0, 256], sizes = [8, 128], strides = [1, 1]} : vector<8x384xf32> to vector<8x128xf32>
    %c0_31 = arith.constant 0 : index
    %c0_32 = arith.constant 0 : index
    %73 = vector.load %arg9[%c0_31, %c0_32] : memref<1x128xf32, #tpu.memory_space<vmem>>, vector<1x128xf32>
    %74 = vector.broadcast %73 : vector<1x128xf32> to vector<8x128xf32>
    %75 = arith.addf %72, %74 : vector<8x128xf32>
    %76 = arith.mulf %62, %75 : vector<8x128xf32>
    %77 = arith.addf %71, %76 : vector<8x128xf32>
    %78 = math.tanh %77 : vector<8x128xf32>
    %cst_33 = arith.constant 1.000000e+00 : f32
    %79 = vector.broadcast %cst_33 : f32 to vector<8x128xf32>
    %80 = arith.subf %79, %70 : vector<8x128xf32>
    %81 = arith.mulf %80, %78 : vector<8x128xf32>
    %82 = arith.mulf %70, %45 : vector<8x128xf32>
    %83 = arith.addf %81, %82 : vector<8x128xf32>
    %c1_34 = arith.constant 1 : index
    %c0_35 = arith.constant 0 : index
    %c0_36 = arith.constant 0 : index
    %84 = vector.load %arg10[%c1_34, %c0_35, %c0_36] : memref<2x8x128xf32, #tpu.memory_space<vmem>>, vector<1x8x128xf32>
    %85 = vector.shape_cast %84 : vector<1x8x128xf32> to vector<8x128xf32>
    %86 = vector.shape_cast %83 : vector<8x128xf32> to vector<1x8x128xf32>
    tpu.vector_store %arg10[%c1_34, %c0_35, %c0_36], %86 {strides = array<i32>} : memref<2x8x128xf32, #tpu.memory_space<vmem>>, vector<1x8x128xf32>,
    return
  }
}

</mosaic_0001>

<llo_original>
// kernel: tpu_custom_call.1
$region0: #{tpu_custom_call.1}
  #allocation0 [shape = 'u32[]', space=smem, size = 0x4, offset = 0x4, fixed_abs, tag = 'smem constant byte address 0x4 - core index']
  #allocation1 [shape = 'u32[144,128]{1,0:T(1,128)}', space=vmem, size = 0x12000, scoped, tag = 'internal scratch']
  %s0 = inlined_call_operand.hbm [shape: f32[8,128], index: 0, kind: input, shape index: {}]
  %s1 = inlined_call_operand.hbm [shape: f32[2,8,128], index: 1, kind: input, shape index: {}]
  %s2 = inlined_call_operand.hbm [shape: bf16[128,384], index: 2, kind: input, shape index: {}]
  %s3 = inlined_call_operand.hbm [shape: bf16[128,384], index: 3, kind: input, shape index: {}]
  %s4 = inlined_call_operand.vmem [shape: f32[1,384], index: 4, kind: input, shape index: {}]
  %s5 = inlined_call_operand.vmem [shape: f32[1,128], index: 5, kind: input, shape index: {}]
  %s6 = inlined_call_operand.hbm [shape: bf16[128,384], index: 6, kind: input, shape index: {}]
  %s7 = inlined_call_operand.hbm [shape: bf16[128,384], index: 7, kind: input, shape index: {}]
  %s8 = inlined_call_operand.vmem [shape: f32[1,384], index: 8, kind: input, shape index: {}]
  %s9 = inlined_call_operand.vmem [shape: f32[1,128], index: 9, kind: input, shape index: {}]
  %s10 = inlined_call_operand.hbm [shape: f32[2,8,128], index: 10, kind: output, shape index: {}]
  %s11 = sld [smem:[#allocation0]]
  $region74: #{tpu_custom_call.1} parent=0
    _
  %s13 = ssub.s32 1, %s11
  %s14 = scalar_select 0, %s13, %s11
  $region1: #{tpu_custom_call.1} parent=0
    #allocation2 [shape = 'u8[4096]{0}', space=vmem, size = 0x1000, scoped, tag = 'input window, operand 0, single buffered']
    #allocation3 [shape = 's32[1]{0}', space=sflag, size = 0x4, scoped, tag = 'scoped memory for tpu_custom_call.1']
    #allocation4 [shape = 's32[1]{0}', space=sflag, size = 0x4, scoped, tag = 'scoped memory for tpu_custom_call.1']
    #allocation5 [shape = 'u8[8192]{0}', space=vmem, size = 0x2000, scoped, tag = 'input window, operand 1, single buffered']
    #allocation6 [shape = 's32[1]{0}', space=sflag, size = 0x4, scoped, tag = 'scoped memory for tpu_custom_call.1']
    #allocation7 [shape = 'u8[98304]{0}', space=vmem, size = 0x18000, scoped, tag = 'input window, operand 2, single buffered']
    #allocation8 [shape = 'u8[98304]{0}', space=vmem, size = 0x18000, scoped, tag = 'input window, operand 3, single buffered']
    #allocation9 [shape = 's32[1]{0}', space=sflag, size = 0x4, scoped, tag = 'scoped memory for tpu_custom_call.1']
    #allocation10 [shape = 'u8[98304]{0}', space=vmem, size = 0x18000, scoped, tag = 'input window, operand 6, single buffered']
    #allocation11 [shape = 'u8[98304]{0}', space=vmem, size = 0x18000, scoped, tag = 'input window, operand 7, single buffered']
    #allocation12 [shape = 's32[1]{0}', space=sflag, size = 0x4, scoped, tag = 'scoped memory for tpu_custom_call.1']
    #allocation13 [shape = 'u8[8192]{0}', space=vmem, size = 0x2000, scoped, tag = 'output window, operand 0, single buffered']
    %15 = vsyncpa [#allocation3], 0
    %16 = vsyncpa [#allocation6], 0
    %17 = vsyncpa [#allocation9], 0
    %18 = vsyncpa [#allocation12], 0
    %19 = vsyncpa [#allocation4], 0
    // Predicated region
    $region2: #{tpu_custom_call.1} parent=1 // pred_check
      _
    $region3: #{tpu_custom_call.1} parent=1 // pred_check_branch
      %21 = sbr.rel (0) target = $region5
    $region4: #{tpu_custom_call.1} parent=1 // pred_region
      %s23 = ssub.s32 128, 128
      %24 = vsyncadd [#allocation3], %s23
      %s26 = sshll.u32 [#allocation2], 4
      %s27 = int_to_ptr.vmem [resolvable:$true] %s26
      %29 = dma.hbm_to_vmem [thread:$0]  %s0, 128, %s27, [#allocation3]
    $region5: #{tpu_custom_call.1} parent=1 // pred_fallthru
      _
    // Predicated region
    $region6: #{tpu_custom_call.1} parent=1 // pred_check
      _
    $region7: #{tpu_custom_call.1} parent=1 // pred_check_branch
      %31 = sbr.rel (0) target = $region9
    $region8: #{tpu_custom_call.1} parent=1 // pred_region
      %s33 = ssub.s32 256, 256
      %34 = vsyncadd [#allocation6], %s33
      %s35 = sshll.u32 [#allocation5], 4
      %s36 = int_to_ptr.vmem [resolvable:$true] %s35
      %41 = dma.hbm_to_vmem [thread:$0]  %s1, 256, %s36, [#allocation6], 128, 128, 8
    $region9: #{tpu_custom_call.1} parent=1 // pred_fallthru
      _
    // Predicated region
    $region10: #{tpu_custom_call.1} parent=1 // pred_check
      _
    $region11: #{tpu_custom_call.1} parent=1 // pred_check_branch
      %43 = sbr.rel (0) target = $region13
    $region12: #{tpu_custom_call.1} parent=1 // pred_region
      %s45 = ssub.s32 3072, 3072
      %46 = vsyncadd [#allocation6], %s45
      %s47 = sshll.u32 [#allocation7], 4
      %s48 = int_to_ptr.vmem [resolvable:$true] %s47
      %53 = dma.hbm_to_vmem [thread:$0]  %s2, 3072, %s48, [#allocation6], 192, 192, 12
    $region13: #{tpu_custom_call.1} parent=1 // pred_fallthru
      _
    // Predicated region
    $region14: #{tpu_custom_call.1} parent=1 // pred_check
      _
    $region15: #{tpu_custom_call.1} parent=1 // pred_check_branch
      %55 = sbr.rel (0) target = $region17
    $region16: #{tpu_custom_call.1} parent=1 // pred_region
      %s57 = ssub.s32 3072, 3072
      %58 = vsyncadd [#allocation9], %s57
      %s59 = sshll.u32 [#allocation8], 4
      %s60 = int_to_ptr.vmem [resolvable:$true] %s59
      %65 = dma.hbm_to_vmem [thread:$0]  %s3, 3072, %s60, [#allocation9], 192, 192, 12
    $region17: #{tpu_custom_call.1} parent=1 // pred_fallthru
      _
    // Predicated region
    $region18: #{tpu_custom_call.1} parent=1 // pred_check
      _
    $region19: #{tpu_custom_call.1} parent=1 // pred_check_branch
      %67 = sbr.rel (0) target = $region21
    $region20: #{tpu_custom_call.1} parent=1 // pred_region
      _
    $region21: #{tpu_custom_call.1} parent=1 // pred_fallthru
      _
    // Predicated region
    $region22: #{tpu_custom_call.1} parent=1 // pred_check
      _
    $region23: #{tpu_custom_call.1} parent=1 // pred_check_branch
      %69 = sbr.rel (0) target = $region25
    $region24: #{tpu_custom_call.1} parent=1 // pred_region
      _
    $region25: #{tpu_custom_call.1} parent=1 // pred_fallthru
      _
    // Predicated region
    $region26: #{tpu_custom_call.1} parent=1 // pred_check
      _
    $region27: #{tpu_custom_call.1} parent=1 // pred_check_branch
      %71 = sbr.rel (0) target = $region29
    $region28: #{tpu_custom_call.1} parent=1 // pred_region
      %s73 = ssub.s32 3072, 3072
      %74 = vsyncadd [#allocation9], %s73
      %s75 = sshll.u32 [#allocation10], 4
      %s76 = int_to_ptr.vmem [resolvable:$true] %s75
      %81 = dma.hbm_to_vmem [thread:$0]  %s6, 3072, %s76, [#allocation9], 192, 192, 12
    $region29: #{tpu_custom_call.1} parent=1 // pred_fallthru
      _
    // Predicated region
    $region30: #{tpu_custom_call.1} parent=1 // pred_check
      _
    $region31: #{tpu_custom_call.1} parent=1 // pred_check_branch
      %83 = sbr.rel (0) target = $region33
    $region32: #{tpu_custom_call.1} parent=1 // pred_region
      %s85 = ssub.s32 3072, 3072
      %86 = vsyncadd [#allocation12], %s85
      %s87 = sshll.u32 [#allocation11], 4
      %s88 = int_to_ptr.vmem [resolvable:$true] %s87
      %93 = dma.hbm_to_vmem [thread:$0]  %s7, 3072, %s88, [#allocation12], 192, 192, 12
    $region33: #{tpu_custom_call.1} parent=1 // pred_fallthru
      _
    // Predicated region
    $region34: #{tpu_custom_call.1} parent=1 // pred_check
      _
    $region35: #{tpu_custom_call.1} parent=1 // pred_check_branch
      %95 = sbr.rel (0) target = $region37
    $region36: #{tpu_custom_call.1} parent=1 // pred_region
      _
    $region37: #{tpu_custom_call.1} parent=1 // pred_fallthru
      _
    // Predicated region
    $region38: #{tpu_custom_call.1} parent=1 // pred_check
      _
    $region39: #{tpu_custom_call.1} parent=1 // pred_check_branch
      %97 = sbr.rel (0) target = $region41
    $region40: #{tpu_custom_call.1} parent=1 // pred_region
      _
    $region41: #{tpu_custom_call.1} parent=1 // pred_fallthru
      _
    // Predicated region
    $region42: #{tpu_custom_call.1} parent=1 // pred_check
      _
    $region43: #{tpu_custom_call.1} parent=1 // pred_check_branch
      %99 = sbr.rel (0) target = $region45
    $region44: #{tpu_custom_call.1} parent=1 // pred_region
      %100 = dma.done [#allocation3], 128
    $region45: #{tpu_custom_call.1} parent=1 // pred_fallthru
      _
    // Predicated region
    $region46: #{tpu_custom_call.1} parent=1 // pred_check
      _
    $region47: #{tpu_custom_call.1} parent=1 // pred_check_branch
      %102 = sbr.rel (0) target = $region49
    $region48: #{tpu_custom_call.1} parent=1 // pred_region
      %103 = dma.done [#allocation6], 256
    $region49: #{tpu_custom_call.1} parent=1 // pred_fallthru
      _
    // Predicated region
    $region50: #{tpu_custom_call.1} parent=1 // pred_check
      _
    $region51: #{tpu_custom_call.1} parent=1 // pred_check_branch
      %105 = sbr.rel (0) target = $region53
    $region52: #{tpu_custom_call.1} parent=1 // pred_region
      %106 = dma.done [#allocation6], 3072
    $region53: #{tpu_custom_call.1} parent=1 // pred_fallthru
      _
    // Predicated region
    $region54: #{tpu_custom_call.1} parent=1 // pred_check
      _
    $region55: #{tpu_custom_call.1} parent=1 // pred_check_branch
      %108 = sbr.rel (0) target = $region57
    $region56: #{tpu_custom_call.1} parent=1 // pred_region
      %109 = dma.done [#allocation9], 3072
    $region57: #{tpu_custom_call.1} parent=1 // pred_fallthru
      _
    // Predicated region
    $region58: #{tpu_custom_call.1} parent=1 // pred_check
      _
    $region59: #{tpu_custom_call.1} parent=1 // pred_check_branch
      %111 = sbr.rel (0) target = $region61
    $region60: #{tpu_custom_call.1} parent=1 // pred_region
      %112 = dma.done [#allocation9], 3072
    $region61: #{tpu_custom_call.1} parent=1 // pred_fallthru
      _
    // Predicated region
    $region62: #{tpu_custom_call.1} parent=1 // pred_check
      _
    $region63: #{tpu_custom_call.1} parent=1 // pred_check_branch
      %114 = sbr.rel (0) target = $region65
    $region64: #{tpu_custom_call.1} parent=1 // pred_region
      %115 = dma.done [#allocation12], 3072
    $region65: #{tpu_custom_call.1} parent=1 // pred_fallthru
      _
    %v116 = vld [vmem:[#allocation2] sm:$0xff]
    %v117 = vld [vmem:[#allocation5] sm:$0xff]
    %v118 = vld [vmem:[#allocation7] sm:$0xff]
    %v119 = vld [vmem:[#allocation7 + $0x8] sm:$0xf]
    %v120 = vld [vmem:[#allocation7 + $0xc] sm:$0xff]
    %v121 = vld [vmem:[#allocation7 + $0x14] sm:$0xf]
    %v122 = vld [vmem:[#allocation7 + $0x18] sm:$0xff]
    %v123 = vld [vmem:[#allocation7 + $0x20] sm:$0xf]
    %v124 = vld [vmem:[#allocation7 + $0x24] sm:$0xff]
    %v125 = vld [vmem:[#allocation7 + $0x2c] sm:$0xf]
    %v126 = vld [vmem:[#allocation7 + $0x30] sm:$0xff]
    %v127 = vld [vmem:[#allocation7 + $0x38] sm:$0xf]
    %v128 = vld [vmem:[#allocation7 + $0x3c] sm:$0xff]
    %v129 = vld [vmem:[#allocation7 + $0x44] sm:$0xf]
    %v130 = vld [vmem:[#allocation7 + $0x48] sm:$0xff]
    %v131 = vld [vmem:[#allocation7 + $0x50] sm:$0xf]
    %v132 = vld [vmem:[#allocation7 + $0x54] sm:$0xff]
    %v133 = vld [vmem:[#allocation7 + $0x5c] sm:$0xf]
    %v134 = vld [vmem:[#allocation7 + $0x60] sm:$0xff]
    %v135 = vld [vmem:[#allocation7 + $0x68] sm:$0xf]
    %v136 = vld [vmem:[#allocation7 + $0x6c] sm:$0xff]
    %v137 = vld [vmem:[#allocation7 + $0x74] sm:$0xf]
    %v138 = vld [vmem:[#allocation7 + $0x78] sm:$0xff]
    %v139 = vld [vmem:[#allocation7 + $0x80] sm:$0xf]
    %v140 = vld [vmem:[#allocation7 + $0x84] sm:$0xff]
    %v141 = vld [vmem:[#allocation7 + $0x8c] sm:$0xf]
    %v142 = vld [vmem:[#allocation7 + $0x90] sm:$0xff]
    %v143 = vld [vmem:[#allocation7 + $0x98] sm:$0xf]
    %v144 = vld [vmem:[#allocation7 + $0x9c] sm:$0xff]
    %v145 = vld [vmem:[#allocation7 + $0xa4] sm:$0xf]
    %v146 = vld [vmem:[#allocation7 + $0xa8] sm:$0xff]
    %v147 = vld [vmem:[#allocation7 + $0xb0] sm:$0xf]
    %v148 = vld [vmem:[#allocation7 + $0xb4] sm:$0xff]
    %v149 = vld [vmem:[#allocation7 + $0xbc] sm:$0xf]
    %v150 = vunpack.c.l.bf16 %v118
    %v151 = vunpack.c.h.bf16 %v118
    %v152 = vunpack.c.l.bf16 %v119
    %v153 = vunpack.c.l.bf16 %v120
    %v154 = vunpack.c.h.bf16 %v120
    %v155 = vunpack.c.l.bf16 %v121
    %v156 = vunpack.c.l.bf16 %v122
    %v157 = vunpack.c.h.bf16 %v122
    %v158 = vunpack.c.l.bf16 %v123
    %v159 = vunpack.c.l.bf16 %v124
    %v160 = vunpack.c.h.bf16 %v124
    %v161 = vunpack.c.l.bf16 %v125
    %v162 = vunpack.c.l.bf16 %v126
    %v163 = vunpack.c.h.bf16 %v126
    %v164 = vunpack.c.l.bf16 %v127
    %v165 = vunpack.c.l.bf16 %v128
    %v166 = vunpack.c.h.bf16 %v128
    %v167 = vunpack.c.l.bf16 %v129
    %v168 = vunpack.c.l.bf16 %v130
    %v169 = vunpack.c.h.bf16 %v130
    %v170 = vunpack.c.l.bf16 %v131
    %v171 = vunpack.c.l.bf16 %v132
    %v172 = vunpack.c.h.bf16 %v132
    %v173 = vunpack.c.l.bf16 %v133
    %v174 = vunpack.c.l.bf16 %v134
    %v175 = vunpack.c.h.bf16 %v134
    %v176 = vunpack.c.l.bf16 %v135
    %v177 = vunpack.c.l.bf16 %v136
    %v178 = vunpack.c.h.bf16 %v136
    %v179 = vunpack.c.l.bf16 %v137
    %v180 = vunpack.c.l.bf16 %v138
    %v181 = vunpack.c.h.bf16 %v138
    %v182 = vunpack.c.l.bf16 %v139
    %v183 = vunpack.c.l.bf16 %v140
    %v184 = vunpack.c.h.bf16 %v140
    %v185 = vunpack.c.l.bf16 %v141
    %v186 = vunpack.c.l.bf16 %v142
    %v187 = vunpack.c.h.bf16 %v142
    %v188 = vunpack.c.l.bf16 %v143
    %v189 = vunpack.c.l.bf16 %v144
    %v190 = vunpack.c.h.bf16 %v144
    %v191 = vunpack.c.l.bf16 %v145
    %v192 = vunpack.c.l.bf16 %v146
    %v193 = vunpack.c.h.bf16 %v146
    %v194 = vunpack.c.l.bf16 %v147
    %v195 = vunpack.c.l.bf16 %v148
    %v196 = vunpack.c.h.bf16 %v148
    %v197 = vunpack.c.l.bf16 %v149
    %v198 = vld [vmem:[%s4] sm:$0x7]
    %v200 = vlaneseq
    %v201 = vshrl.u32 %v200, 7
    %v202 = vsub.s32 0, %v201
    %v203 = vrot.slane %v198, %v202
    %v204 = vlaneseq
    %v205 = vshrl.u32 %v204, 7
    %v206 = vsub.s32 1, %v205
    %v207 = vrot.slane %v198, %v206
    %v208 = vlaneseq
    %v209 = vshrl.u32 %v208, 7
    %v210 = vsub.s32 2, %v209
    %v211 = vrot.slane %v198, %v210
    %215 = vmatprep.subr.mxu0 %v196
    %216 = vmatpush1.msra.mxu0 %v195
    %217 = vmatprep.subr.mxu0 %v193
    %218 = vmatpush1.msra.mxu0 %v192
    %219 = vmatprep.subr.mxu0 %v190
    %220 = vmatpush1.msra.mxu0 %v189
    %221 = vmatprep.subr.mxu0 %v187
    %222 = vmatpush1.msra.mxu0 %v186
    %223 = vmatprep.subr.mxu0 %v184
    %224 = vmatpush1.msra.mxu0 %v183
    %225 = vmatprep.subr.mxu0 %v181
    %226 = vmatpush1.msra.mxu0 %v180
    %227 = vmatprep.subr.mxu0 %v178
    %228 = vmatpush1.msra.mxu0 %v177
    %229 = vmatprep.subr.mxu0 %v175
    %230 = vmatpush1.msra.mxu0 %v174
    %231 = vmatprep.subr.mxu0 %v172
    %232 = vmatpush1.msra.mxu0 %v171
    %233 = vmatprep.subr.mxu0 %v169
    %234 = vmatpush1.msra.mxu0 %v168
    %235 = vmatprep.subr.mxu0 %v166
    %236 = vmatpush1.msra.mxu0 %v165
    %237 = vmatprep.subr.mxu0 %v163
    %238 = vmatpush1.msra.mxu0 %v162
    %239 = vmatprep.subr.mxu0 %v160
    %240 = vmatpush1.msra.mxu0 %v159
    %241 = vmatprep.subr.mxu0 %v157
    %242 = vmatpush1.msra.mxu0 %v156
    %243 = vmatprep.subr.mxu0 %v154
    %244 = vmatpush1.msra.mxu0 %v153
    %245 = vmatprep.subr.mxu0 %v151
    %246 = vmatpush1.msra.mxu0 %v150
    %247 = vmatprep.subr.mxu0 0.0
    %248 = vmatpush2.msra.mxu0 0.0
    %249 = vmatprep.subr.mxu0 0.0
    %250 = vmatpush2.msra.mxu0 0.0
    %251 = vmatprep.subr.mxu0 0.0
    %252 = vmatpush2.msra.mxu0 0.0
    %253 = vmatprep.subr.mxu0 0.0
    %254 = vmatpush2.msra.mxu0 0.0
    %255 = vmatprep.subr.mxu0 0.0
    %256 = vmatpush2.msra.mxu0 0.0
    %257 = vmatprep.subr.mxu0 0.0
    %258 = vmatpush2.msra.mxu0 0.0
    %259 = vmatprep.subr.mxu0 0.0
    %260 = vmatpush2.msra.mxu0 0.0
    %261 = vmatprep.subr.mxu0 0.0
    %262 = vmatpush2.msra.mxu0 0.0
    %263 = vmatprep.subr.mxu0 0.0
    %264 = vmatpush2.msra.mxu0 0.0
    %265 = vmatprep.subr.mxu0 0.0
    %266 = vmatpush2.msra.mxu0 0.0
    %267 = vmatprep.subr.mxu0 0.0
    %268 = vmatpush2.msra.mxu0 0.0
    %269 = vmatprep.subr.mxu0 0.0
    %270 = vmatpush2.msra.mxu0 0.0
    %271 = vmatprep.subr.mxu0 0.0
    %272 = vmatpush2.msra.mxu0 0.0
    %273 = vmatprep.subr.mxu0 0.0
    %274 = vmatpush2.msra.mxu0 0.0
    %275 = vmatprep.subr.mxu0 0.0
    %276 = vmatpush2.msra.mxu0 0.0
    %277 = vmatprep.subr.mxu0 0.0
    %278 = vmatpush2.msra.mxu0 0.0
    %279 = vmatprep.mubr.f32.mxu0 0.0
    %280 = vmatmul.mubr.f32.gmra.mxu0 %v116
    %v281 = vpop.f32.mrf.mxu0
    %v282 = vadd.f32 %v203, %v281
    %v283 = vpop.f32.mrf.mxu0
    %v284 = vadd.f32 %v207, %v283
    %285 = vdwg.mxu0
    %286 = vmatprep.subr.mxu0 0.0
    %287 = vmatpush1.msra.mxu0 %v197
    %288 = vmatprep.subr.mxu0 0.0
    %289 = vmatpush1.msra.mxu0 %v194
    %290 = vmatprep.subr.mxu0 0.0
    %291 = vmatpush1.msra.mxu0 %v191
    %292 = vmatprep.subr.mxu0 0.0
    %293 = vmatpush1.msra.mxu0 %v188
    %294 = vmatprep.subr.mxu0 0.0
    %295 = vmatpush1.msra.mxu0 %v185
    %296 = vmatprep.subr.mxu0 0.0
    %297 = vmatpush1.msra.mxu0 %v182
    %298 = vmatprep.subr.mxu0 0.0
    %299 = vmatpush1.msra.mxu0 %v179
    %300 = vmatprep.subr.mxu0 0.0
    %301 = vmatpush1.msra.mxu0 %v176
    %302 = vmatprep.subr.mxu0 0.0
    %303 = vmatpush1.msra.mxu0 %v173
    %304 = vmatprep.subr.mxu0 0.0
    %305 = vmatpush1.msra.mxu0 %v170
    %306 = vmatprep.subr.mxu0 0.0
    %307 = vmatpush1.msra.mxu0 %v167
    %308 = vmatprep.subr.mxu0 0.0
    %309 = vmatpush1.msra.mxu0 %v164
    %310 = vmatprep.subr.mxu0 0.0
    %311 = vmatpush1.msra.mxu0 %v161
    %312 = vmatprep.subr.mxu0 0.0
    %313 = vmatpush1.msra.mxu0 %v158
    %314 = vmatprep.subr.mxu0 0.0
    %315 = vmatpush1.msra.mxu0 %v155
    %316 = vmatprep.subr.mxu0 0.0
    %317 = vmatpush1.msra.mxu0 %v152
    %318 = vmatprep.subr.mxu0 0.0
    %319 = vmatpush2.msra.mxu0 0.0
    %320 = vmatprep.subr.mxu0 0.0
    %321 = vmatpush2.msra.mxu0 0.0
    %322 = vmatprep.subr.mxu0 0.0
    %323 = vmatpush2.msra.mxu0 0.0
    %324 = vmatprep.subr.mxu0 0.0
    %325 = vmatpush2.msra.mxu0 0.0
    %326 = vmatprep.subr.mxu0 0.0
    %327 = vmatpush2.msra.mxu0 0.0
    %328 = vmatprep.subr.mxu0 0.0
    %329 = vmatpush2.msra.mxu0 0.0
    %330 = vmatprep.subr.mxu0 0.0
    %331 = vmatpush2.msra.mxu0 0.0
    %332 = vmatprep.subr.mxu0 0.0
    %333 = vmatpush2.msra.mxu0 0.0
    %334 = vmatprep.subr.mxu0 0.0
    %335 = vmatpush2.msra.mxu0 0.0
    %336 = vmatprep.subr.mxu0 0.0
    %337 = vmatpush2.msra.mxu0 0.0
    %338 = vmatprep.subr.mxu0 0.0
    %339 = vmatpush2.msra.mxu0 0.0
    %340 = vmatprep.subr.mxu0 0.0
    %341 = vmatpush2.msra.mxu0 0.0
    %342 = vmatprep.subr.mxu0 0.0
    %343 = vmatpush2.msra.mxu0 0.0
    %344 = vmatprep.subr.mxu0 0.0
    %345 = vmatpush2.msra.mxu0 0.0
    %346 = vmatprep.subr.mxu0 0.0
    %347 = vmatpush2.msra.mxu0 0.0
    %348 = vmatprep.subr.mxu0 0.0
    %349 = vmatpush2.msra.mxu0 0.0
    %350 = vmatprep.mubr.f32.mxu0 0.0
    %351 = vmatmul.mubr.f32.gmra.mxu0 %v116
    %v352 = vpop.f32.mrf.mxu0
    %v353 = vadd.f32 %v211, %v352
    %v354 = vpop.f32.mrf.mxu0
    %355 = vdwg.mxu0
    %v356 = vld [vmem:[#allocation8] sm:$0xff]
    %v357 = vld [vmem:[#allocation8 + $0x8] sm:$0xf]
    %v358 = vld [vmem:[#allocation8 + $0xc] sm:$0xff]
    %v359 = vld [vmem:[#allocation8 + $0x14] sm:$0xf]
    %v360 = vld [vmem:[#allocation8 + $0x18] sm:$0xff]
    %v361 = vld [vmem:[#allocation8 + $0x20] sm:$0xf]
    %v362 = vld [vmem:[#allocation8 + $0x24] sm:$0xff]
    %v363 = vld [vmem:[#allocation8 + $0x2c] sm:$0xf]
    %v364 = vld [vmem:[#allocation8 + $0x30] sm:$0xff]
    %v365 = vld [vmem:[#allocation8 + $0x38] sm:$0xf]
    %v366 = vld [vmem:[#allocation8 + $0x3c] sm:$0xff]
    %v367 = vld [vmem:[#allocation8 + $0x44] sm:$0xf]
    %v368 = vld [vmem:[#allocation8 + $0x48] sm:$0xff]
    %v369 = vld [vmem:[#allocation8 + $0x50] sm:$0xf]
    %v370 = vld [vmem:[#allocation8 + $0x54] sm:$0xff]
    %v371 = vld [vmem:[#allocation8 + $0x5c] sm:$0xf]
    %v372 = vld [vmem:[#allocation8 + $0x60] sm:$0xff]
    %v373 = vld [vmem:[#allocation8 + $0x68] sm:$0xf]
    %v374 = vld [vmem:[#allocation8 + $0x6c] sm:$0xff]
    %v375 = vld [vmem:[#allocation8 + $0x74] sm:$0xf]
    %v376 = vld [vmem:[#allocation8 + $0x78] sm:$0xff]
    %v377 = vld [vmem:[#allocation8 + $0x80] sm:$0xf]
    %v378 = vld [vmem:[#allocation8 + $0x84] sm:$0xff]
    %v379 = vld [vmem:[#allocation8 + $0x8c] sm:$0xf]
    %v380 = vld [vmem:[#allocation8 + $0x90] sm:$0xff]
    %v381 = vld [vmem:[#allocation8 + $0x98] sm:$0xf]
    %v382 = vld [vmem:[#allocation8 + $0x9c] sm:$0xff]
    %v383 = vld [vmem:[#allocation8 + $0xa4] sm:$0xf]
    %v384 = vld [vmem:[#allocation8 + $0xa8] sm:$0xff]
    %v385 = vld [vmem:[#allocation8 + $0xb0] sm:$0xf]
    %v386 = vld [vmem:[#allocation8 + $0xb4] sm:$0xff]
    %v387 = vld [vmem:[#allocation8 + $0xbc] sm:$0xf]
    %v388 = vunpack.c.l.bf16 %v356
    %v389 = vunpack.c.h.bf16 %v356
    %v390 = vunpack.c.l.bf16 %v357
    %v391 = vunpack.c.l.bf16 %v358
    %v392 = vunpack.c.h.bf16 %v358
    %v393 = vunpack.c.l.bf16 %v359
    %v394 = vunpack.c.l.bf16 %v360
    %v395 = vunpack.c.h.bf16 %v360
    %v396 = vunpack.c.l.bf16 %v361
    %v397 = vunpack.c.l.bf16 %v362
    %v398 = vunpack.c.h.bf16 %v362
    %v399 = vunpack.c.l.bf16 %v363
    %v400 = vunpack.c.l.bf16 %v364
    %v401 = vunpack.c.h.bf16 %v364
    %v402 = vunpack.c.l.bf16 %v365
    %v403 = vunpack.c.l.bf16 %v366
    %v404 = vunpack.c.h.bf16 %v366
    %v405 = vunpack.c.l.bf16 %v367
    %v406 = vunpack.c.l.bf16 %v368
    %v407 = vunpack.c.h.bf16 %v368
    %v408 = vunpack.c.l.bf16 %v369
    %v409 = vunpack.c.l.bf16 %v370
    %v410 = vunpack.c.h.bf16 %v370
    %v411 = vunpack.c.l.bf16 %v371
    %v412 = vunpack.c.l.bf16 %v372
    %v413 = vunpack.c.h.bf16 %v372
    %v414 = vunpack.c.l.bf16 %v373
    %v415 = vunpack.c.l.bf16 %v374
    %v416 = vunpack.c.h.bf16 %v374
    %v417 = vunpack.c.l.bf16 %v375
    %v418 = vunpack.c.l.bf16 %v376
    %v419 = vunpack.c.h.bf16 %v376
    %v420 = vunpack.c.l.bf16 %v377
    %v421 = vunpack.c.l.bf16 %v378
    %v422 = vunpack.c.h.bf16 %v378
    %v423 = vunpack.c.l.bf16 %v379
    %v424 = vunpack.c.l.bf16 %v380
    %v425 = vunpack.c.h.bf16 %v380
    %v426 = vunpack.c.l.bf16 %v381
    %v427 = vunpack.c.l.bf16 %v382
    %v428 = vunpack.c.h.bf16 %v382
    %v429 = vunpack.c.l.bf16 %v383
    %v430 = vunpack.c.l.bf16 %v384
    %v431 = vunpack.c.h.bf16 %v384
    %v432 = vunpack.c.l.bf16 %v385
    %v433 = vunpack.c.l.bf16 %v386
    %v434 = vunpack.c.h.bf16 %v386
    %v435 = vunpack.c.l.bf16 %v387
    %436 = vmatprep.subr.mxu0 %v434
    %437 = vmatpush1.msra.mxu0 %v433
    %438 = vmatprep.subr.mxu0 %v431
    %439 = vmatpush1.msra.mxu0 %v430
    %440 = vmatprep.subr.mxu0 %v428
    %441 = vmatpush1.msra.mxu0 %v427
    %442 = vmatprep.subr.mxu0 %v425
    %443 = vmatpush1.msra.mxu0 %v424
    %444 = vmatprep.subr.mxu0 %v422
    %445 = vmatpush1.msra.mxu0 %v421
    %446 = vmatprep.subr.mxu0 %v419
    %447 = vmatpush1.msra.mxu0 %v418
    %448 = vmatprep.subr.mxu0 %v416
    %449 = vmatpush1.msra.mxu0 %v415
    %450 = vmatprep.subr.mxu0 %v413
    %451 = vmatpush1.msra.mxu0 %v412
    %452 = vmatprep.subr.mxu0 %v410
    %453 = vmatpush1.msra.mxu0 %v409
    %454 = vmatprep.subr.mxu0 %v407
    %455 = vmatpush1.msra.mxu0 %v406
    %456 = vmatprep.subr.mxu0 %v404
    %457 = vmatpush1.msra.mxu0 %v403
    %458 = vmatprep.subr.mxu0 %v401
    %459 = vmatpush1.msra.mxu0 %v400
    %460 = vmatprep.subr.mxu0 %v398
    %461 = vmatpush1.msra.mxu0 %v397
    %462 = vmatprep.subr.mxu0 %v395
    %463 = vmatpush1.msra.mxu0 %v394
    %464 = vmatprep.subr.mxu0 %v392
    %465 = vmatpush1.msra.mxu0 %v391
    %466 = vmatprep.subr.mxu0 %v389
    %467 = vmatpush1.msra.mxu0 %v388
    %468 = vmatprep.subr.mxu0 0.0
    %469 = vmatpush2.msra.mxu0 0.0
    %470 = vmatprep.subr.mxu0 0.0
    %471 = vmatpush2.msra.mxu0 0.0
    %472 = vmatprep.subr.mxu0 0.0
    %473 = vmatpush2.msra.mxu0 0.0
    %474 = vmatprep.subr.mxu0 0.0
    %475 = vmatpush2.msra.mxu0 0.0
    %476 = vmatprep.subr.mxu0 0.0
    %477 = vmatpush2.msra.mxu0 0.0
    %478 = vmatprep.subr.mxu0 0.0
    %479 = vmatpush2.msra.mxu0 0.0
    %480 = vmatprep.subr.mxu0 0.0
    %481 = vmatpush2.msra.mxu0 0.0
    %482 = vmatprep.subr.mxu0 0.0
    %483 = vmatpush2.msra.mxu0 0.0
    %484 = vmatprep.subr.mxu0 0.0
    %485 = vmatpush2.msra.mxu0 0.0
    %486 = vmatprep.subr.mxu0 0.0
    %487 = vmatpush2.msra.mxu0 0.0
    %488 = vmatprep.subr.mxu0 0.0
    %489 = vmatpush2.msra.mxu0 0.0
    %490 = vmatprep.subr.mxu0 0.0
    %491 = vmatpush2.msra.mxu0 0.0
    %492 = vmatprep.subr.mxu0 0.0
    %493 = vmatpush2.msra.mxu0 0.0
    %494 = vmatprep.subr.mxu0 0.0
    %495 = vmatpush2.msra.mxu0 0.0
    %496 = vmatprep.subr.mxu0 0.0
    %497 = vmatpush2.msra.mxu0 0.0
    %498 = vmatprep.subr.mxu0 0.0
    %499 = vmatpush2.msra.mxu0 0.0
    %500 = vmatprep.mubr.f32.mxu0 0.0
    %501 = vmatmul.mubr.f32.gmra.mxu0 %v117
    %v502 = vpop.f32.mrf.mxu0
    %v503 = vadd.f32 0.0, %v502
    %v504 = vpop.f32.mrf.mxu0
    %v505 = vadd.f32 0.0, %v504
    %506 = vdwg.mxu0
    %507 = vmatprep.subr.mxu0 0.0
    %508 = vmatpush1.msra.mxu0 %v435
    %509 = vmatprep.subr.mxu0 0.0
    %510 = vmatpush1.msra.mxu0 %v432
    %511 = vmatprep.subr.mxu0 0.0
    %512 = vmatpush1.msra.mxu0 %v429
    %513 = vmatprep.subr.mxu0 0.0
    %514 = vmatpush1.msra.mxu0 %v426
    %515 = vmatprep.subr.mxu0 0.0
    %516 = vmatpush1.msra.mxu0 %v423
    %517 = vmatprep.subr.mxu0 0.0
    %518 = vmatpush1.msra.mxu0 %v420
    %519 = vmatprep.subr.mxu0 0.0
    %520 = vmatpush1.msra.mxu0 %v417
    %521 = vmatprep.subr.mxu0 0.0
    %522 = vmatpush1.msra.mxu0 %v414
    %523 = vmatprep.subr.mxu0 0.0
    %524 = vmatpush1.msra.mxu0 %v411
    %525 = vmatprep.subr.mxu0 0.0
    %526 = vmatpush1.msra.mxu0 %v408
    %527 = vmatprep.subr.mxu0 0.0
    %528 = vmatpush1.msra.mxu0 %v405
    %529 = vmatprep.subr.mxu0 0.0
    %530 = vmatpush1.msra.mxu0 %v402
    %531 = vmatprep.subr.mxu0 0.0
    %532 = vmatpush1.msra.mxu0 %v399
    %533 = vmatprep.subr.mxu0 0.0
    %534 = vmatpush1.msra.mxu0 %v396
    %535 = vmatprep.subr.mxu0 0.0
    %536 = vmatpush1.msra.mxu0 %v393
    %537 = vmatprep.subr.mxu0 0.0
    %538 = vmatpush1.msra.mxu0 %v390
    %539 = vmatprep.subr.mxu0 0.0
    %540 = vmatpush2.msra.mxu0 0.0
    %541 = vmatprep.subr.mxu0 0.0
    %542 = vmatpush2.msra.mxu0 0.0
    %543 = vmatprep.subr.mxu0 0.0
    %544 = vmatpush2.msra.mxu0 0.0
    %545 = vmatprep.subr.mxu0 0.0
    %546 = vmatpush2.msra.mxu0 0.0
    %547 = vmatprep.subr.mxu0 0.0
    %548 = vmatpush2.msra.mxu0 0.0
    %549 = vmatprep.subr.mxu0 0.0
    %550 = vmatpush2.msra.mxu0 0.0
    %551 = vmatprep.subr.mxu0 0.0
    %552 = vmatpush2.msra.mxu0 0.0
    %553 = vmatprep.subr.mxu0 0.0
    %554 = vmatpush2.msra.mxu0 0.0
    %555 = vmatprep.subr.mxu0 0.0
    %556 = vmatpush2.msra.mxu0 0.0
    %557 = vmatprep.subr.mxu0 0.0
    %558 = vmatpush2.msra.mxu0 0.0
    %559 = vmatprep.subr.mxu0 0.0
    %560 = vmatpush2.msra.mxu0 0.0
    %561 = vmatprep.subr.mxu0 0.0
    %562 = vmatpush2.msra.mxu0 0.0
    %563 = vmatprep.subr.mxu0 0.0
    %564 = vmatpush2.msra.mxu0 0.0
    %565 = vmatprep.subr.mxu0 0.0
    %566 = vmatpush2.msra.mxu0 0.0
    %567 = vmatprep.subr.mxu0 0.0
    %568 = vmatpush2.msra.mxu0 0.0
    %569 = vmatprep.subr.mxu0 0.0
    %570 = vmatpush2.msra.mxu0 0.0
    %571 = vmatprep.mubr.f32.mxu0 0.0
    %572 = vmatmul.mubr.f32.gmra.mxu0 %v117
    %v573 = vpop.f32.mrf.mxu0
    %v574 = vadd.f32 0.0, %v573
    %v575 = vpop.f32.mrf.mxu0
    %576 = vdwg.mxu0
    %v577 = vadd.f32 %v282, %v503
    %v578 = vxor.u32 %v577, 2147483648
    %v579 = vmul.f32 %v578, 1.442695
    %v580 = vpow.pop %v579
    %v581 = vadd.f32 %v580, 1.0
    %v582 = vrcp.pop %v581
    %v583 = vmul.f32 1.0, %v582
    %v584 = vadd.f32 %v284, %v505
    %v585 = vxor.u32 %v584, 2147483648
    %v586 = vmul.f32 %v585, 1.442695
    %v587 = vpow.pop %v586
    %v588 = vadd.f32 %v587, 1.0
    %v589 = vrcp.pop %v588
    %v590 = vmul.f32 1.0, %v589
    %v591 = vld [vmem:[%s5] sm:$0x1]
    %v593 = vlaneseq
    %v594 = vshrl.u32 %v593, 7
    %v595 = vsub.s32 0, %v594
    %v596 = vrot.slane %v591, %v595
    %v598 = vadd.f32 %v574, %v596
    %v599 = vmul.f32 %v583, %v598
    %v600 = vadd.f32 %v353, %v599
    %v601 = vtanh.pop %v600
    %v602 = vsub.f32 1.0, %v590
    %v603 = vmul.f32 %v602, %v601
    %v604 = vmul.f32 %v590, %v117
    %v605 = vadd.f32 %v603, %v604
    %606 = vst [vmem:[#allocation13] sm:$0xff] %v605
    %s607 = scalar_lea.vmem [#allocation5], 8
    %v608 = vld [vmem:[%s607] sm:$0xff]
    %v609 = vld [vmem:[#allocation10] sm:$0xff]
    %v610 = vld [vmem:[#allocation10 + $0x8] sm:$0xf]
    %v611 = vld [vmem:[#allocation10 + $0xc] sm:$0xff]
    %v612 = vld [vmem:[#allocation10 + $0x14] sm:$0xf]
    %v613 = vld [vmem:[#allocation10 + $0x18] sm:$0xff]
    %v614 = vld [vmem:[#allocation10 + $0x20] sm:$0xf]
    %v615 = vld [vmem:[#allocation10 + $0x24] sm:$0xff]
    %v616 = vld [vmem:[#allocation10 + $0x2c] sm:$0xf]
    %v617 = vld [vmem:[#allocation10 + $0x30] sm:$0xff]
    %v618 = vld [vmem:[#allocation10 + $0x38] sm:$0xf]
    %v619 = vld [vmem:[#allocation10 + $0x3c] sm:$0xff]
    %v620 = vld [vmem:[#allocation10 + $0x44] sm:$0xf]
    %v621 = vld [vmem:[#allocation10 + $0x48] sm:$0xff]
    %v622 = vld [vmem:[#allocation10 + $0x50] sm:$0xf]
    %v623 = vld [vmem:[#allocation10 + $0x54] sm:$0xff]
    %v624 = vld [vmem:[#allocation10 + $0x5c] sm:$0xf]
    %v625 = vld [vmem:[#allocation10 + $0x60] sm:$0xff]
    %v626 = vld [vmem:[#allocation10 + $0x68] sm:$0xf]
    %v627 = vld [vmem:[#allocation10 + $0x6c] sm:$0xff]
    %v628 = vld [vmem:[#allocation10 + $0x74] sm:$0xf]
    %v629 = vld [vmem:[#allocation10 + $0x78] sm:$0xff]
    %v630 = vld [vmem:[#allocation10 + $0x80] sm:$0xf]
    %v631 = vld [vmem:[#allocation10 + $0x84] sm:$0xff]
    %v632 = vld [vmem:[#allocation10 + $0x8c] sm:$0xf]
    %v633 = vld [vmem:[#allocation10 + $0x90] sm:$0xff]
    %v634 = vld [vmem:[#allocation10 + $0x98] sm:$0xf]
    %v635 = vld [vmem:[#allocation10 + $0x9c] sm:$0xff]
    %v636 = vld [vmem:[#allocation10 + $0xa4] sm:$0xf]
    %v637 = vld [vmem:[#allocation10 + $0xa8] sm:$0xff]
    %v638 = vld [vmem:[#allocation10 + $0xb0] sm:$0xf]
    %v639 = vld [vmem:[#allocation10 + $0xb4] sm:$0xff]
    %v640 = vld [vmem:[#allocation10 + $0xbc] sm:$0xf]
    %v641 = vunpack.c.l.bf16 %v609
    %v642 = vunpack.c.h.bf16 %v609
    %v643 = vunpack.c.l.bf16 %v610
    %v644 = vunpack.c.l.bf16 %v611
    %v645 = vunpack.c.h.bf16 %v611
    %v646 = vunpack.c.l.bf16 %v612
    %v647 = vunpack.c.l.bf16 %v613
    %v648 = vunpack.c.h.bf16 %v613
    %v649 = vunpack.c.l.bf16 %v614
    %v650 = vunpack.c.l.bf16 %v615
    %v651 = vunpack.c.h.bf16 %v615
    %v652 = vunpack.c.l.bf16 %v616
    %v653 = vunpack.c.l.bf16 %v617
    %v654 = vunpack.c.h.bf16 %v617
    %v655 = vunpack.c.l.bf16 %v618
    %v656 = vunpack.c.l.bf16 %v619
    %v657 = vunpack.c.h.bf16 %v619
    %v658 = vunpack.c.l.bf16 %v620
    %v659 = vunpack.c.l.bf16 %v621
    %v660 = vunpack.c.h.bf16 %v621
    %v661 = vunpack.c.l.bf16 %v622
    %v662 = vunpack.c.l.bf16 %v623
    %v663 = vunpack.c.h.bf16 %v623
    %v664 = vunpack.c.l.bf16 %v624
    %v665 = vunpack.c.l.bf16 %v625
    %v666 = vunpack.c.h.bf16 %v625
    %v667 = vunpack.c.l.bf16 %v626
    %v668 = vunpack.c.l.bf16 %v627
    %v669 = vunpack.c.h.bf16 %v627
    %v670 = vunpack.c.l.bf16 %v628
    %v671 = vunpack.c.l.bf16 %v629
    %v672 = vunpack.c.h.bf16 %v629
    %v673 = vunpack.c.l.bf16 %v630
    %v674 = vunpack.c.l.bf16 %v631
    %v675 = vunpack.c.h.bf16 %v631
    %v676 = vunpack.c.l.bf16 %v632
    %v677 = vunpack.c.l.bf16 %v633
    %v678 = vunpack.c.h.bf16 %v633
    %v679 = vunpack.c.l.bf16 %v634
    %v680 = vunpack.c.l.bf16 %v635
    %v681 = vunpack.c.h.bf16 %v635
    %v682 = vunpack.c.l.bf16 %v636
    %v683 = vunpack.c.l.bf16 %v637
    %v684 = vunpack.c.h.bf16 %v637
    %v685 = vunpack.c.l.bf16 %v638
    %v686 = vunpack.c.l.bf16 %v639
    %v687 = vunpack.c.h.bf16 %v639
    %v688 = vunpack.c.l.bf16 %v640
    %v689 = vld [vmem:[%s8] sm:$0x7]
    %v691 = vlaneseq
    %v692 = vshrl.u32 %v691, 7
    %v693 = vsub.s32 0, %v692
    %v694 = vrot.slane %v689, %v693
    %v695 = vlaneseq
    %v696 = vshrl.u32 %v695, 7
    %v697 = vsub.s32 1, %v696
    %v698 = vrot.slane %v689, %v697
    %v699 = vlaneseq
    %v700 = vshrl.u32 %v699, 7
    %v701 = vsub.s32 2, %v700
    %v702 = vrot.slane %v689, %v701
    %706 = vmatprep.subr.mxu0 %v687
    %707 = vmatpush1.msra.mxu0 %v686
    %708 = vmatprep.subr.mxu0 %v684
    %709 = vmatpush1.msra.mxu0 %v683
    %710 = vmatprep.subr.mxu0 %v681
    %711 = vmatpush1.msra.mxu0 %v680
    %712 = vmatprep.subr.mxu0 %v678
    %713 = vmatpush1.msra.mxu0 %v677
    %714 = vmatprep.subr.mxu0 %v675
    %715 = vmatpush1.msra.mxu0 %v674
    %716 = vmatprep.subr.mxu0 %v672
    %717 = vmatpush1.msra.mxu0 %v671
    %718 = vmatprep.subr.mxu0 %v669
    %719 = vmatpush1.msra.mxu0 %v668
    %720 = vmatprep.subr.mxu0 %v666
    %721 = vmatpush1.msra.mxu0 %v665
    %722 = vmatprep.subr.mxu0 %v663
    %723 = vmatpush1.msra.mxu0 %v662
    %724 = vmatprep.subr.mxu0 %v660
    %725 = vmatpush1.msra.mxu0 %v659
    %726 = vmatprep.subr.mxu0 %v657
    %727 = vmatpush1.msra.mxu0 %v656
    %728 = vmatprep.subr.mxu0 %v654
    %729 = vmatpush1.msra.mxu0 %v653
    %730 = vmatprep.subr.mxu0 %v651
    %731 = vmatpush1.msra.mxu0 %v650
    %732 = vmatprep.subr.mxu0 %v648
    %733 = vmatpush1.msra.mxu0 %v647
    %734 = vmatprep.subr.mxu0 %v645
    %735 = vmatpush1.msra.mxu0 %v644
    %736 = vmatprep.subr.mxu0 %v642
    %737 = vmatpush1.msra.mxu0 %v641
    %738 = vmatprep.subr.mxu0 0.0
    %739 = vmatpush2.msra.mxu0 0.0
    %740 = vmatprep.subr.mxu0 0.0
    %741 = vmatpush2.msra.mxu0 0.0
    %742 = vmatprep.subr.mxu0 0.0
    %743 = vmatpush2.msra.mxu0 0.0
    %744 = vmatprep.subr.mxu0 0.0
    %745 = vmatpush2.msra.mxu0 0.0
    %746 = vmatprep.subr.mxu0 0.0
    %747 = vmatpush2.msra.mxu0 0.0
    %748 = vmatprep.subr.mxu0 0.0
    %749 = vmatpush2.msra.mxu0 0.0
    %750 = vmatprep.subr.mxu0 0.0
    %751 = vmatpush2.msra.mxu0 0.0
    %752 = vmatprep.subr.mxu0 0.0
    %753 = vmatpush2.msra.mxu0 0.0
    %754 = vmatprep.subr.mxu0 0.0
    %755 = vmatpush2.msra.mxu0 0.0
    %756 = vmatprep.subr.mxu0 0.0
    %757 = vmatpush2.msra.mxu0 0.0
    %758 = vmatprep.subr.mxu0 0.0
    %759 = vmatpush2.msra.mxu0 0.0
    %760 = vmatprep.subr.mxu0 0.0
    %761 = vmatpush2.msra.mxu0 0.0
    %762 = vmatprep.subr.mxu0 0.0
    %763 = vmatpush2.msra.mxu0 0.0
    %764 = vmatprep.subr.mxu0 0.0
    %765 = vmatpush2.msra.mxu0 0.0
    %766 = vmatprep.subr.mxu0 0.0
    %767 = vmatpush2.msra.mxu0 0.0
    %768 = vmatprep.subr.mxu0 0.0
    %769 = vmatpush2.msra.mxu0 0.0
    %770 = vmatprep.mubr.f32.mxu0 0.0
    %771 = vmatmul.mubr.f32.gmra.mxu0 %v605
    %v772 = vpop.f32.mrf.mxu0
    %v773 = vadd.f32 %v694, %v772
    %v774 = vpop.f32.mrf.mxu0
    %v775 = vadd.f32 %v698, %v774
    %776 = vdwg.mxu0
    %777 = vmatprep.subr.mxu0 0.0
    %778 = vmatpush1.msra.mxu0 %v688
    %779 = vmatprep.subr.mxu0 0.0
    %780 = vmatpush1.msra.mxu0 %v685
    %781 = vmatprep.subr.mxu0 0.0
    %782 = vmatpush1.msra.mxu0 %v682
    %783 = vmatprep.subr.mxu0 0.0
    %784 = vmatpush1.msra.mxu0 %v679
    %785 = vmatprep.subr.mxu0 0.0
    %786 = vmatpush1.msra.mxu0 %v676
    %787 = vmatprep.subr.mxu0 0.0
    %788 = vmatpush1.msra.mxu0 %v673
    %789 = vmatprep.subr.mxu0 0.0
    %790 = vmatpush1.msra.mxu0 %v670
    %791 = vmatprep.subr.mxu0 0.0
    %792 = vmatpush1.msra.mxu0 %v667
    %793 = vmatprep.subr.mxu0 0.0
    %794 = vmatpush1.msra.mxu0 %v664
    %795 = vmatprep.subr.mxu0 0.0
    %796 = vmatpush1.msra.mxu0 %v661
    %797 = vmatprep.subr.mxu0 0.0
    %798 = vmatpush1.msra.mxu0 %v658
    %799 = vmatprep.subr.mxu0 0.0
    %800 = vmatpush1.msra.mxu0 %v655
    %801 = vmatprep.subr.mxu0 0.0
    %802 = vmatpush1.msra.mxu0 %v652
    %803 = vmatprep.subr.mxu0 0.0
    %804 = vmatpush1.msra.mxu0 %v649
    %805 = vmatprep.subr.mxu0 0.0
    %806 = vmatpush1.msra.mxu0 %v646
    %807 = vmatprep.subr.mxu0 0.0
    %808 = vmatpush1.msra.mxu0 %v643
    %809 = vmatprep.subr.mxu0 0.0
    %810 = vmatpush2.msra.mxu0 0.0
    %811 = vmatprep.subr.mxu0 0.0
    %812 = vmatpush2.msra.mxu0 0.0
    %813 = vmatprep.subr.mxu0 0.0
    %814 = vmatpush2.msra.mxu0 0.0
    %815 = vmatprep.subr.mxu0 0.0
    %816 = vmatpush2.msra.mxu0 0.0
    %817 = vmatprep.subr.mxu0 0.0
    %818 = vmatpush2.msra.mxu0 0.0
    %819 = vmatprep.subr.mxu0 0.0
    %820 = vmatpush2.msra.mxu0 0.0
    %821 = vmatprep.subr.mxu0 0.0
    %822 = vmatpush2.msra.mxu0 0.0
    %823 = vmatprep.subr.mxu0 0.0
    %824 = vmatpush2.msra.mxu0 0.0
    %825 = vmatprep.subr.mxu0 0.0
    %826 = vmatpush2.msra.mxu0 0.0
    %827 = vmatprep.subr.mxu0 0.0
    %828 = vmatpush2.msra.mxu0 0.0
    %829 = vmatprep.subr.mxu0 0.0
    %830 = vmatpush2.msra.mxu0 0.0
    %831 = vmatprep.subr.mxu0 0.0
    %832 = vmatpush2.msra.mxu0 0.0
    %833 = vmatprep.subr.mxu0 0.0
    %834 = vmatpush2.msra.mxu0 0.0
    %835 = vmatprep.subr.mxu0 0.0
    %836 = vmatpush2.msra.mxu0 0.0
    %837 = vmatprep.subr.mxu0 0.0
    %838 = vmatpush2.msra.mxu0 0.0
    %839 = vmatprep.subr.mxu0 0.0
    %840 = vmatpush2.msra.mxu0 0.0
    %841 = vmatprep.mubr.f32.mxu0 0.0
    %842 = vmatmul.mubr.f32.gmra.mxu0 %v605
    %v843 = vpop.f32.mrf.mxu0
    %v844 = vadd.f32 %v702, %v843
    %v845 = vpop.f32.mrf.mxu0
    %846 = vdwg.mxu0
    %v847 = vld [vmem:[#allocation11] sm:$0xff]
    %v848 = vld [vmem:[#allocation11 + $0x8] sm:$0xf]
    %v849 = vld [vmem:[#allocation11 + $0xc] sm:$0xff]
    %v850 = vld [vmem:[#allocation11 + $0x14] sm:$0xf]
    %v851 = vld [vmem:[#allocation11 + $0x18] sm:$0xff]
    %v852 = vld [vmem:[#allocation11 + $0x20] sm:$0xf]
    %v853 = vld [vmem:[#allocation11 + $0x24] sm:$0xff]
    %v854 = vld [vmem:[#allocation11 + $0x2c] sm:$0xf]
    %v855 = vld [vmem:[#allocation11 + $0x30] sm:$0xff]
    %v856 = vld [vmem:[#allocation11 + $0x38] sm:$0xf]
    %v857 = vld [vmem:[#allocation11 + $0x3c] sm:$0xff]
    %v858 = vld [vmem:[#allocation11 + $0x44] sm:$0xf]
    %v859 = vld [vmem:[#allocation11 + $0x48] sm:$0xff]
    %v860 = vld [vmem:[#allocation11 + $0x50] sm:$0xf]
    %v861 = vld [vmem:[#allocation11 + $0x54] sm:$0xff]
    %v862 = vld [vmem:[#allocation11 + $0x5c] sm:$0xf]
    %v863 = vld [vmem:[#allocation11 + $0x60] sm:$0xff]
    %v864 = vld [vmem:[#allocation11 + $0x68] sm:$0xf]
    %v865 = vld [vmem:[#allocation11 + $0x6c] sm:$0xff]
    %v866 = vld [vmem:[#allocation11 + $0x74] sm:$0xf]
    %v867 = vld [vmem:[#allocation11 + $0x78] sm:$0xff]
    %v868 = vld [vmem:[#allocation11 + $0x80] sm:$0xf]
    %v869 = vld [vmem:[#allocation11 + $0x84] sm:$0xff]
    %v870 = vld [vmem:[#allocation11 + $0x8c] sm:$0xf]
    %v871 = vld [vmem:[#allocation11 + $0x90] sm:$0xff]
    %v872 = vld [vmem:[#allocation11 + $0x98] sm:$0xf]
    %v873 = vld [vmem:[#allocation11 + $0x9c] sm:$0xff]
    %v874 = vld [vmem:[#allocation11 + $0xa4] sm:$0xf]
    %v875 = vld [vmem:[#allocation11 + $0xa8] sm:$0xff]
    %v876 = vld [vmem:[#allocation11 + $0xb0] sm:$0xf]
    %v877 = vld [vmem:[#allocation11 + $0xb4] sm:$0xff]
    %v878 = vld [vmem:[#allocation11 + $0xbc] sm:$0xf]
    %v879 = vunpack.c.l.bf16 %v847
    %v880 = vunpack.c.h.bf16 %v847
    %v881 = vunpack.c.l.bf16 %v848
    %v882 = vunpack.c.l.bf16 %v849
    %v883 = vunpack.c.h.bf16 %v849
    %v884 = vunpack.c.l.bf16 %v850
    %v885 = vunpack.c.l.bf16 %v851
    %v886 = vunpack.c.h.bf16 %v851
    %v887 = vunpack.c.l.bf16 %v852
    %v888 = vunpack.c.l.bf16 %v853
    %v889 = vunpack.c.h.bf16 %v853
    %v890 = vunpack.c.l.bf16 %v854
    %v891 = vunpack.c.l.bf16 %v855
    %v892 = vunpack.c.h.bf16 %v855
    %v893 = vunpack.c.l.bf16 %v856
    %v894 = vunpack.c.l.bf16 %v857
    %v895 = vunpack.c.h.bf16 %v857
    %v896 = vunpack.c.l.bf16 %v858
    %v897 = vunpack.c.l.bf16 %v859
    %v898 = vunpack.c.h.bf16 %v859
    %v899 = vunpack.c.l.bf16 %v860
    %v900 = vunpack.c.l.bf16 %v861
    %v901 = vunpack.c.h.bf16 %v861
    %v902 = vunpack.c.l.bf16 %v862
    %v903 = vunpack.c.l.bf16 %v863
    %v904 = vunpack.c.h.bf16 %v863
    %v905 = vunpack.c.l.bf16 %v864
    %v906 = vunpack.c.l.bf16 %v865
    %v907 = vunpack.c.h.bf16 %v865
    %v908 = vunpack.c.l.bf16 %v866
    %v909 = vunpack.c.l.bf16 %v867
    %v910 = vunpack.c.h.bf16 %v867
    %v911 = vunpack.c.l.bf16 %v868
    %v912 = vunpack.c.l.bf16 %v869
    %v913 = vunpack.c.h.bf16 %v869
    %v914 = vunpack.c.l.bf16 %v870
    %v915 = vunpack.c.l.bf16 %v871
    %v916 = vunpack.c.h.bf16 %v871
    %v917 = vunpack.c.l.bf16 %v872
    %v918 = vunpack.c.l.bf16 %v873
    %v919 = vunpack.c.h.bf16 %v873
    %v920 = vunpack.c.l.bf16 %v874
    %v921 = vunpack.c.l.bf16 %v875
    %v922 = vunpack.c.h.bf16 %v875
    %v923 = vunpack.c.l.bf16 %v876
    %v924 = vunpack.c.l.bf16 %v877
    %v925 = vunpack.c.h.bf16 %v877
    %v926 = vunpack.c.l.bf16 %v878
    %927 = vmatprep.subr.mxu0 %v925
    %928 = vmatpush1.msra.mxu0 %v924
    %929 = vmatprep.subr.mxu0 %v922
    %930 = vmatpush1.msra.mxu0 %v921
    %931 = vmatprep.subr.mxu0 %v919
    %932 = vmatpush1.msra.mxu0 %v918
    %933 = vmatprep.subr.mxu0 %v916
    %934 = vmatpush1.msra.mxu0 %v915
    %935 = vmatprep.subr.mxu0 %v913
    %936 = vmatpush1.msra.mxu0 %v912
    %937 = vmatprep.subr.mxu0 %v910
    %938 = vmatpush1.msra.mxu0 %v909
    %939 = vmatprep.subr.mxu0 %v907
    %940 = vmatpush1.msra.mxu0 %v906
    %941 = vmatprep.subr.mxu0 %v904
    %942 = vmatpush1.msra.mxu0 %v903
    %943 = vmatprep.subr.mxu0 %v901
    %944 = vmatpush1.msra.mxu0 %v900
    %945 = vmatprep.subr.mxu0 %v898
    %946 = vmatpush1.msra.mxu0 %v897
    %947 = vmatprep.subr.mxu0 %v895
    %948 = vmatpush1.msra.mxu0 %v894
    %949 = vmatprep.subr.mxu0 %v892
    %950 = vmatpush1.msra.mxu0 %v891
    %951 = vmatprep.subr.mxu0 %v889
    %952 = vmatpush1.msra.mxu0 %v888
    %953 = vmatprep.subr.mxu0 %v886
    %954 = vmatpush1.msra.mxu0 %v885
    %955 = vmatprep.subr.mxu0 %v883
    %956 = vmatpush1.msra.mxu0 %v882
    %957 = vmatprep.subr.mxu0 %v880
    %958 = vmatpush1.msra.mxu0 %v879
    %959 = vmatprep.subr.mxu0 0.0
    %960 = vmatpush2.msra.mxu0 0.0
    %961 = vmatprep.subr.mxu0 0.0
    %962 = vmatpush2.msra.mxu0 0.0
    %963 = vmatprep.subr.mxu0 0.0
    %964 = vmatpush2.msra.mxu0 0.0
    %965 = vmatprep.subr.mxu0 0.0
    %966 = vmatpush2.msra.mxu0 0.0
    %967 = vmatprep.subr.mxu0 0.0
    %968 = vmatpush2.msra.mxu0 0.0
    %969 = vmatprep.subr.mxu0 0.0
    %970 = vmatpush2.msra.mxu0 0.0
    %971 = vmatprep.subr.mxu0 0.0
    %972 = vmatpush2.msra.mxu0 0.0
    %973 = vmatprep.subr.mxu0 0.0
    %974 = vmatpush2.msra.mxu0 0.0
    %975 = vmatprep.subr.mxu0 0.0
    %976 = vmatpush2.msra.mxu0 0.0
    %977 = vmatprep.subr.mxu0 0.0
    %978 = vmatpush2.msra.mxu0 0.0
    %979 = vmatprep.subr.mxu0 0.0
    %980 = vmatpush2.msra.mxu0 0.0
    %981 = vmatprep.subr.mxu0 0.0
    %982 = vmatpush2.msra.mxu0 0.0
    %983 = vmatprep.subr.mxu0 0.0
    %984 = vmatpush2.msra.mxu0 0.0
    %985 = vmatprep.subr.mxu0 0.0
    %986 = vmatpush2.msra.mxu0 0.0
    %987 = vmatprep.subr.mxu0 0.0
    %988 = vmatpush2.msra.mxu0 0.0
    %989 = vmatprep.subr.mxu0 0.0
    %990 = vmatpush2.msra.mxu0 0.0
    %991 = vmatprep.mubr.f32.mxu0 0.0
    %992 = vmatmul.mubr.f32.gmra.mxu0 %v608
    %v993 = vpop.f32.mrf.mxu0
    %v994 = vadd.f32 0.0, %v993
    %v995 = vpop.f32.mrf.mxu0
    %v996 = vadd.f32 0.0, %v995
    %997 = vdwg.mxu0
    %998 = vmatprep.subr.mxu0 0.0
    %999 = vmatpush1.msra.mxu0 %v926
    %1000 = vmatprep.subr.mxu0 0.0
    %1001 = vmatpush1.msra.mxu0 %v923
    %1002 = vmatprep.subr.mxu0 0.0
    %1003 = vmatpush1.msra.mxu0 %v920
    %1004 = vmatprep.subr.mxu0 0.0
    %1005 = vmatpush1.msra.mxu0 %v917
    %1006 = vmatprep.subr.mxu0 0.0
    %1007 = vmatpush1.msra.mxu0 %v914
    %1008 = vmatprep.subr.mxu0 0.0
    %1009 = vmatpush1.msra.mxu0 %v911
    %1010 = vmatprep.subr.mxu0 0.0
    %1011 = vmatpush1.msra.mxu0 %v908
    %1012 = vmatprep.subr.mxu0 0.0
    %1013 = vmatpush1.msra.mxu0 %v905
    %1014 = vmatprep.subr.mxu0 0.0
    %1015 = vmatpush1.msra.mxu0 %v902
    %1016 = vmatprep.subr.mxu0 0.0
    %1017 = vmatpush1.msra.mxu0 %v899
    %1018 = vmatprep.subr.mxu0 0.0
    %1019 = vmatpush1.msra.mxu0 %v896
    %1020 = vmatprep.subr.mxu0 0.0
    %1021 = vmatpush1.msra.mxu0 %v893
    %1022 = vmatprep.subr.mxu0 0.0
    %1023 = vmatpush1.msra.mxu0 %v890
    %1024 = vmatprep.subr.mxu0 0.0
    %1025 = vmatpush1.msra.mxu0 %v887
    %1026 = vmatprep.subr.mxu0 0.0
    %1027 = vmatpush1.msra.mxu0 %v884
    %1028 = vmatprep.subr.mxu0 0.0
    %1029 = vmatpush1.msra.mxu0 %v881
    %1030 = vmatprep.subr.mxu0 0.0
    %1031 = vmatpush2.msra.mxu0 0.0
    %1032 = vmatprep.subr.mxu0 0.0
    %1033 = vmatpush2.msra.mxu0 0.0
    %1034 = vmatprep.subr.mxu0 0.0
    %1035 = vmatpush2.msra.mxu0 0.0
    %1036 = vmatprep.subr.mxu0 0.0
    %1037 = vmatpush2.msra.mxu0 0.0
    %1038 = vmatprep.subr.mxu0 0.0
    %1039 = vmatpush2.msra.mxu0 0.0
    %1040 = vmatprep.subr.mxu0 0.0
    %1041 = vmatpush2.msra.mxu0 0.0
    %1042 = vmatprep.subr.mxu0 0.0
    %1043 = vmatpush2.msra.mxu0 0.0
    %1044 = vmatprep.subr.mxu0 0.0
    %1045 = vmatpush2.msra.mxu0 0.0
    %1046 = vmatprep.subr.mxu0 0.0
    %1047 = vmatpush2.msra.mxu0 0.0
    %1048 = vmatprep.subr.mxu0 0.0
    %1049 = vmatpush2.msra.mxu0 0.0
    %1050 = vmatprep.subr.mxu0 0.0
    %1051 = vmatpush2.msra.mxu0 0.0
    %1052 = vmatprep.subr.mxu0 0.0
    %1053 = vmatpush2.msra.mxu0 0.0
    %1054 = vmatprep.subr.mxu0 0.0
    %1055 = vmatpush2.msra.mxu0 0.0
    %1056 = vmatprep.subr.mxu0 0.0
    %1057 = vmatpush2.msra.mxu0 0.0
    %1058 = vmatprep.subr.mxu0 0.0
    %1059 = vmatpush2.msra.mxu0 0.0
    %1060 = vmatprep.subr.mxu0 0.0
    %1061 = vmatpush2.msra.mxu0 0.0
    %1062 = vmatprep.mubr.f32.mxu0 0.0
    %1063 = vmatmul.mubr.f32.gmra.mxu0 %v608
    %v1064 = vpop.f32.mrf.mxu0
    %v1065 = vadd.f32 0.0, %v1064
    %v1066 = vpop.f32.mrf.mxu0
    %1067 = vdwg.mxu0
    %v1068 = vadd.f32 %v773, %v994
    %v1069 = vxor.u32 %v1068, 2147483648
    %v1070 = vmul.f32 %v1069, 1.442695
    %v1071 = vpow.pop %v1070
    %v1072 = vadd.f32 %v1071, 1.0
    %v1073 = vrcp.pop %v1072
    %v1074 = vmul.f32 1.0, %v1073
    %v1075 = vadd.f32 %v775, %v996
    %v1076 = vxor.u32 %v1075, 2147483648
    %v1077 = vmul.f32 %v1076, 1.442695
    %v1078 = vpow.pop %v1077
    %v1079 = vadd.f32 %v1078, 1.0
    %v1080 = vrcp.pop %v1079
    %v1081 = vmul.f32 1.0, %v1080
    %v1082 = vld [vmem:[%s9] sm:$0x1]
    %v1084 = vlaneseq
    %v1085 = vshrl.u32 %v1084, 7
    %v1086 = vsub.s32 0, %v1085
    %v1087 = vrot.slane %v1082, %v1086
    %v1089 = vadd.f32 %v1065, %v1087
    %v1090 = vmul.f32 %v1074, %v1089
    %v1091 = vadd.f32 %v844, %v1090
    %v1092 = vtanh.pop %v1091
    %v1093 = vsub.f32 1.0, %v1081
    %v1094 = vmul.f32 %v1093, %v1092
    %v1095 = vmul.f32 %v1081, %v608
    %v1096 = vadd.f32 %v1094, %v1095
    %s1097 = scalar_lea.vmem [#allocation13], 8
    %1098 = vst [vmem:[%s1097] sm:$0xff] %v1096
    // Predicated region
    $region66: #{tpu_custom_call.1} parent=1 // pred_check
      _
    $region67: #{tpu_custom_call.1} parent=1 // pred_check_branch
      %1100 = sbr.rel (0) target = $region69
    $region68: #{tpu_custom_call.1} parent=1 // pred_region
      %s1102 = ssub.s32 256, 256
      %1103 = vsyncadd [#allocation4], %s1102
      %s1104 = sshll.u32 [#allocation13], 4
      %s1105 = int_to_ptr.vmem [resolvable:$true] %s1104
      %1110 = dma.vmem_to_hbm [thread:$0]  %s1105, 256, %s10, [#allocation4], 128, 128, 8
    $region69: #{tpu_custom_call.1} parent=1 // pred_fallthru
      _
    // Predicated region
    $region70: #{tpu_custom_call.1} parent=1 // pred_check
      _
    $region71: #{tpu_custom_call.1} parent=1 // pred_check_branch
      %1112 = sbr.rel (0) target = $region73
    $region72: #{tpu_custom_call.1} parent=1 // pred_region
      %1113 = dma.done [#allocation4], 256
    $region73: #{tpu_custom_call.1} parent=1 // pred_fallthru
      _
    %1114 = vsyncpa [#allocation3], 1
    %1115 = vsyncpa [#allocation6], 1
    %1116 = vsyncpa [#allocation9], 1
    %1117 = vsyncpa [#allocation12], 1
    %1118 = vsyncpa [#allocation4], 1

</llo_original>
